<compile_context>
chip_gen: v5e
topology: v5e:2x2
jax: 0.10.0
libtpu: 0.0.40
codegen_flags: <defaults>
</compile_context>

<pallas_src>
import jax
import jax.numpy as jnp
from jax.experimental import pallas as pl
from jax.experimental.pallas import tpu as pltpu


def _logreg_kernel(x_ref, w_ref, b_ref, o_ref):
    # x_ref: (TB, D), w_ref: (1, D) resident, b_ref: (1,) f32 in SMEM, o_ref: (TB, 1)
    x = x_ref[...].astype(jnp.float32)              # upcast in-kernel (v5e VPU has no bf16)
    w = w_ref[...].astype(jnp.float32)              # (1, D) broadcasts over the batch tile
    z = jnp.sum(x * w, axis=-1, keepdims=True)      # (TB, 1) == x @ W^T, f32 accumulate
    z = z + b_ref[0]                                # scalar bias from SMEM
    o_ref[...] = jax.nn.sigmoid(z).astype(o_ref.dtype)   # single store per output tile


def _pick_batch_tile(batch, input_dim, itemsize, vmem_budget_bytes=8 * 1024 * 1024):
    """Largest batch tile (multiple of 8) whose double-buffered x block fits the budget.

    Budget is conservative (~8 MiB for the x stream) so it stays well inside
    v7x's 64 MiB physical / 32 MiB default-scoped VMEM and v5e's 16 MiB default.
    """
    tb = vmem_budget_bytes // (2 * input_dim * itemsize)
    tb = max(8, (tb // 8) * 8)
    tb = min(tb, 1024)                       # diminishing returns past ~1k rows
    padded_batch = ((batch + 7) // 8) * 8    # never larger than the (padded) batch
    return min(tb, padded_batch)


def logistic_regression_forward(x, weight, bias, *, batch_tile=None):
    """sigmoid(x @ weight.T + bias); x: (B, D), weight: (1, D), bias: (1,) -> (B, 1)."""
    B, D = x.shape
    w_row = jnp.reshape(weight, (1, D))                    # stays resident in VMEM
    b_smem = jnp.reshape(bias, (1,)).astype(jnp.float32)   # scalar bias -> SMEM

    tb = batch_tile if batch_tile is not None else _pick_batch_tile(
        B, D, jnp.dtype(x.dtype).itemsize)
    grid = (pl.cdiv(B, tb),)                               # partial last tile is masked

    return pl.pallas_call(
        _logreg_kernel,
        out_shape=jax.ShapeDtypeStruct((B, 1), x.dtype),
        grid=grid,
        in_specs=[
            pl.BlockSpec((tb, D), lambda i: (i, 0)),       # batch-tiled, full D extent
            pl.BlockSpec((1, D), lambda i: (0, 0)),        # weights: same block every step
            pl.BlockSpec(memory_space=pltpu.SMEM),         # bias scalar lives in SMEM
        ],
        out_specs=pl.BlockSpec((tb, 1), lambda i: (i, 0)),
        compiler_params=pltpu.CompilerParams(
            dimension_semantics=("parallel",),             # shard batch across TCs on v7x
        ),
    )(x, w_row, b_smem)


def _reference(x, weight, bias):
    # Exact f32 elementwise reduction — same math as the kernel.
    return jax.nn.sigmoid(jnp.sum(x * weight, axis=-1, keepdims=True) + bias)


if __name__ == "__main__":
    batch, input_dim = 8, 32

    key = jax.random.PRNGKey(0)
    kx, kw, kb = jax.random.split(key, 3)

    # Deterministic inputs / parameters (PyTorch nn.Linear-style uniform init).
    x = jax.random.normal(kx, (batch, input_dim), dtype=jnp.float32)
    bound = 1.0 / (input_dim ** 0.5)
    weight = jax.random.uniform(kw, (1, input_dim), minval=-bound, maxval=bound,
                                dtype=jnp.float32)
    bias = jax.random.uniform(kb, (1,), minval=-bound, maxval=bound,
                              dtype=jnp.float32)

    out = logistic_regression_forward(x, weight, bias)
    out = jax.block_until_ready(out)
    assert out.shape == (batch, 1)
    assert jnp.allclose(out, _reference(x, weight, bias), atol=1e-5, rtol=1e-5)

    # Exercise the batch grid: multiple tiles and a partial (masked) last tile.
    x2 = jax.random.normal(kx, (20, input_dim), dtype=jnp.float32)
    out2 = jax.block_until_ready(
        logistic_regression_forward(x2, weight, bias, batch_tile=8))   # grid = (3,)
    assert out2.shape == (20, 1)
    assert jnp.allclose(out2, _reference(x2, weight, bias), atol=1e-5, rtol=1e-5)

    print("KERNEL_OK")
</pallas_src>

<mosaic_0001>
module attributes {stable_mosaic.version = 11 : i64} {
  func.func @_logreg_kernel(%arg0: i32, %arg1: memref<8x32xf32, #tpu.memory_space<vmem>>, %arg2: memref<1x32xf32, #tpu.memory_space<vmem>>, %arg3: memref<1xf32, #tpu.memory_space<smem>>, %arg4: memref<8x1xf32, #tpu.memory_space<vmem>>) attributes {dimension_semantics = [#tpu.dimension_semantics<parallel>], iteration_bounds = array<i64: 1>, scalar_prefetch = 0 : i64, scratch_operands = 0 : i64, tpu.core_type = #tpu.core_type<tc>, window_params = [{transform_indices = @transform_0, window_bounds = array<i64: 8, 32>}, {pipeline_mode = #tpu.pipeline_mode<synchronous>, transform_indices = @transform_1, window_bounds = array<i64: 1, 32>}, {transform_indices = @transform_2, window_bounds = array<i64: 1>}, {transform_indices = @transform_3, window_bounds = array<i64: 8, 1>}]} {
    %c0 = arith.constant 0 : index
    %c0_0 = arith.constant 0 : index
    %0 = vector.load %arg1[%c0, %c0_0] : memref<8x32xf32, #tpu.memory_space<vmem>>, vector<8x32xf32>
    %c0_1 = arith.constant 0 : index
    %c0_2 = arith.constant 0 : index
    %1 = vector.load %arg2[%c0_1, %c0_2] : memref<1x32xf32, #tpu.memory_space<vmem>>, vector<1x32xf32>
    %2 = vector.broadcast %1 : vector<1x32xf32> to vector<8x32xf32>
    %3 = arith.mulf %0, %2 : vector<8x32xf32>
    %cst = arith.constant dense<0.000000e+00> : vector<8xf32>
    %4 = vector.multi_reduction <add>, %3, %cst [1] : vector<8x32xf32> to vector<8xf32>
    %5 = vector.shape_cast %4 : vector<8xf32> to vector<8x1xf32>
    %c0_3 = arith.constant 0 : index
    %6 = memref.load %arg3[%c0_3] : memref<1xf32, #tpu.memory_space<smem>>
    %7 = vector.broadcast %6 : f32 to vector<8x1xf32>
    %8 = arith.addf %5, %7 : vector<8x1xf32>
    %9 = arith.negf %8 : vector<8x1xf32>
    %10 = math.exp %9 : vector<8x1xf32>
    %cst_4 = arith.constant 1.000000e+00 : f32
    %11 = vector.broadcast %cst_4 : f32 to vector<8x1xf32>
    %12 = arith.addf %11, %10 : vector<8x1xf32>
    %13 = arith.divf %11, %12 : vector<8x1xf32>
    %c0_5 = arith.constant 0 : index
    %c0_6 = arith.constant 0 : index
    %14 = vector.load %arg4[%c0_5, %c0_6] : memref<8x1xf32, #tpu.memory_space<vmem>>, vector<8x1xf32>
    tpu.vector_store %arg4[%c0_5, %c0_6], %13 {strides = array<i32>} : memref<8x1xf32, #tpu.memory_space<vmem>>, vector<8x1xf32>,
    return
  }
  func.func @transform_0(%arg0: i32) -> (i32, i32) {
    %c0_i32 = arith.constant 0 : i32
    %c0_i32_0 = arith.constant 0 : i32
    return %arg0, %c0_i32 : i32, i32
  }
  func.func @transform_1(%arg0: i32) -> (i32, i32) {
    %c0_i32 = arith.constant 0 : i32
    %c0_i32_0 = arith.constant 0 : i32
    %c0_i32_1 = arith.constant 0 : i32
    return %c0_i32, %c0_i32_0 : i32, i32
  }
  func.func @transform_2(%arg0: i32) -> i32 {
    %c0_i32 = arith.constant 0 : i32
    %c0_i32_0 = arith.constant 0 : i32
    return %c0_i32 : i32
  }
  func.func @transform_3(%arg0: i32) -> (i32, i32) {
    %c0_i32 = arith.constant 0 : i32
    %c0_i32_0 = arith.constant 0 : i32
    return %arg0, %c0_i32 : i32, i32
  }
}

</mosaic_0001>

<llo_original>
// kernel: tpu_custom_call.1
$region0: #{tpu_custom_call.1}
  #allocation0 [shape = 'u32[]', space=smem, size = 0x4, offset = 0x4, fixed_abs, tag = 'smem constant byte address 0x4 - core index']
  #allocation1 [shape = 'u32[72,128]{1,0:T(1,128)}', space=vmem, size = 0x9000, scoped, tag = 'internal scratch']
  #allocation2 [shape = 'f32[1]{0:T(128)S(6)}', space=smem, size = 0x200, scoped, tag = 'scoped memory for tpu_custom_call.1']
  %s0 = inlined_call_operand.hbm [shape: f32[8,32], index: 0, kind: input, shape index: {}]
  %s1 = inlined_call_operand.vmem [shape: f32[1,32], index: 1, kind: input, shape index: {}]
  %s2 = inlined_call_operand.<no memory space> [shape: f32[1], index: 2, kind: input, shape index: {}]
  %s3 = inlined_call_operand.vmem [shape: f32[8,1], index: 3, kind: output, shape index: {}]
  %s4 = sld [smem:[#allocation0]]
  $region26: #{tpu_custom_call.1} parent=0
    _
  %s6 = ssub.s32 1, %s4
  %s7 = scalar_select 0, %s6, %s4
  %8 = sst [smem:[#allocation2]] %s2
  $region1: #{tpu_custom_call.1} parent=0
    #allocation3 [shape = 'u8[4096]{0}', space=vmem, size = 0x1000, scoped, tag = 'input window, operand 0, single buffered']
    #allocation4 [shape = 's32[1]{0}', space=sflag, size = 0x4, scoped, tag = 'scoped memory for tpu_custom_call.1']
    %9 = vsyncpa [#allocation4], 0
    // Predicated region
    $region2: #{tpu_custom_call.1} parent=1 // pred_check
      _
    $region3: #{tpu_custom_call.1} parent=1 // pred_check_branch
      %11 = sbr.rel (0) target = $region5
    $region4: #{tpu_custom_call.1} parent=1 // pred_region
      %13 = vsyncadd [#allocation4], 0
      %s15 = sshll.u32 %s0, 4
      %s16 = int_to_ptr.hbm [resolvable:$true] %s15
      %s17 = sshll.u32 [#allocation3], 4
      %s18 = int_to_ptr.vmem [resolvable:$true] %s17
      %20 = dma.hbm_to_vmem [thread:$0]  %s16, 128, %s18, [#allocation4]
    $region5: #{tpu_custom_call.1} parent=1 // pred_fallthru
      _
    // Predicated region
    $region6: #{tpu_custom_call.1} parent=1 // pred_check
      _
    $region7: #{tpu_custom_call.1} parent=1 // pred_check_branch
      %22 = sbr.rel (0) target = $region9
    $region8: #{tpu_custom_call.1} parent=1 // pred_region
      _
    $region9: #{tpu_custom_call.1} parent=1 // pred_fallthru
      _
    // Predicated region
    $region10: #{tpu_custom_call.1} parent=1 // pred_check
      _
    $region11: #{tpu_custom_call.1} parent=1 // pred_check_branch
      %24 = sbr.rel (0) target = $region13
    $region12: #{tpu_custom_call.1} parent=1 // pred_region
      _
    $region13: #{tpu_custom_call.1} parent=1 // pred_fallthru
      _
    // Predicated region
    $region14: #{tpu_custom_call.1} parent=1 // pred_check
      _
    $region15: #{tpu_custom_call.1} parent=1 // pred_check_branch
      %26 = sbr.rel (0) target = $region17
    $region16: #{tpu_custom_call.1} parent=1 // pred_region
      %28 = dma.done [#allocation4], 128
    $region17: #{tpu_custom_call.1} parent=1 // pred_fallthru
      _
    %v29 = vld [vmem:[#allocation3] sm:$0xff]
    %v30 = vld [vmem:[%s1] sm:$0x1]
    %v32 = vperm.slane %v30, 0
    %v34 = vmul.f32 %v29, %v32
    %vm35 = vcmask 261120
    %v36 = vsel %vm35, %v34, 0.0
    %37 = vadd.xlane.f32.xlu0 %v36
    %v38 = vpop.xlane.xlu0 %37
    %s39 = sld [smem:[#allocation2]]
    %v40 = vstv %s39
    %v41 = vadd.f32 %v38, %v40
    %v42 = vxor.u32 %v41, 2147483648
    %v43 = vmul.f32 %v42, 1.442695
    %v44 = vpow.pop %v43
    %v45 = vadd.f32 %v44, 1.0
    %v46 = vrcp.pop %v45
    %v47 = vmul.f32 %v45, %v46
    %v48 = vsub.f32 1.0, %v47
    %v49 = vmul.f32 %v46, %v48
    %v50 = vadd.f32 %v46, %v49
    %vm51 = vweird.f32 %v45
    %vm52 = vweird.f32 %v46
    %vm53 = vmor %vm51, %vm52
    %v54 = vsel %vm53, %v46, %v50
    %v55 = vand.u32 2147483647, %v45
    %vm56 = vcmp.eq.f32.partialorder %v55, 8.507059e+37
    %v57 = vand.u32 %v45, 2147483648
    %v58 = vor.u32 1.1754944e-38, %v57
    %v59 = vsel %vm56, %v58, %v54
    %v60 = vmul.f32 1.0, %v59
    %vm61 = vcmask 7168
    %62 = vst.msk [vmem:[%s3] sm:$0xff] %vm61, %v60
    // Predicated region
    $region18: #{tpu_custom_call.1} parent=1 // pred_check
      _
    $region19: #{tpu_custom_call.1} parent=1 // pred_check_branch
      %64 = sbr.rel (0) target = $region21
    $region20: #{tpu_custom_call.1} parent=1 // pred_region
      _
    $region21: #{tpu_custom_call.1} parent=1 // pred_fallthru
      _
    // Predicated region
    $region22: #{tpu_custom_call.1} parent=1 // pred_check
      _
    $region23: #{tpu_custom_call.1} parent=1 // pred_check_branch
      %66 = sbr.rel (0) target = $region25
    $region24: #{tpu_custom_call.1} parent=1 // pred_region
      _
    $region25: #{tpu_custom_call.1} parent=1 // pred_fallthru
      _
    %67 = vsyncpa [#allocation4], 1

</llo_original>
